<compile_context>
chip_gen: v7x
topology: tpu7x:2x2x1
jax: 0.10.0
libtpu: 0.0.40
codegen_flags: <defaults>
</compile_context>

<pallas_src>
import functools

import jax
import jax.numpy as jnp
from jax.experimental import pallas as pl
from jax.experimental.pallas import tpu as pltpu


def _round_up(x: int, m: int) -> int:
    return ((x + m - 1) // m) * m


def _ctc_kernel(x_ref, w_enc_ref, b_enc_ref, w_out_ref, b_out_ref, o_ref):
    # x_ref:     (TR, Dp)  bf16 row tile of the flattened, padded (rows_p, Dp) input
    # w_enc_ref: (Dp, Dp)  bf16 encoder weight (in x out), resident in VMEM
    # b_enc_ref: (1, Dp)   f32
    # w_out_ref: (Dp, Vp)  bf16 ScaledLinear weight (in x out), resident in VMEM
    # b_out_ref: (1, Vp)   f32 (padded vocab columns carry a -1e30 bias)
    # o_ref:     (TR, Vp)  f32 log-probabilities

    # --- synthetic encoder: Linear(D, D) + ReLU (bf16 MXU, f32 accumulate) ---
    h = jnp.dot(x_ref[...], w_enc_ref[...], preferred_element_type=jnp.float32)
    h = jnp.maximum(h + b_enc_ref[...], 0.0)

    # --- ctc_output_module: Dropout(0.1) [identity in eval] + ScaledLinear ---
    logits = jnp.dot(h.astype(jnp.bfloat16), w_out_ref[...],
                     preferred_element_type=jnp.float32)
    logits = logits + b_out_ref[...]

    # --- log_softmax over vocab (lane) dim, all in f32 ------------------------
    m = jnp.max(logits, axis=-1, keepdims=True)
    s = logits - m
    lse = jnp.log(jnp.sum(jnp.exp(s), axis=-1, keepdims=True))
    o_ref[...] = s - lse


@functools.partial(jax.jit, static_argnames=("tile_rows",))
def ctc_model_forward(x, x_lens, w_enc, b_enc, w_out, b_out, *, tile_rows=512):
    """Fused encoder stand-in + CTC-output Pallas kernel.

    Args:
      x:      (N, T, D) float32
      x_lens: (N,) int32 — passed through as encoder_out_lens
      w_enc:  (D, D), b_enc: (D,)
      w_out:  (D, V), b_out: (V,)
      tile_rows: row-tile size (sweep 256/512/1024; shrink for v7x / huge vocab)
    Returns:
      (nnet_output (N, T, V) f32 log-probs, encoder_out_lens (N,))
    """
    N, T, D = x.shape
    V = w_out.shape[1]
    rows = N * T

    # Lane-dense padding of feature / vocab dims to multiples of 128.
    Dp = _round_up(max(D, 128), 128)
    Vp = _round_up(max(V, 128), 128)

    # Effective row tile: multiple of 16 (bf16 sublane packing), never larger
    # than the (padded) row count so small inputs are not over-padded.
    tr = max(16, min(_round_up(tile_rows, 16), _round_up(rows, 16)))
    rows_p = _round_up(rows, tr)

    # --- wrapper-side packing: pad + cast matmul operands to bf16 once -------
    x2 = jnp.zeros((rows_p, Dp), jnp.bfloat16).at[:rows, :D].set(
        x.reshape(rows, D).astype(jnp.bfloat16))
    w_enc_p = jnp.zeros((Dp, Dp), jnp.bfloat16).at[:D, :D].set(
        w_enc.astype(jnp.bfloat16))
    w_out_p = jnp.zeros((Dp, Vp), jnp.bfloat16).at[:D, :V].set(
        w_out.astype(jnp.bfloat16))
    b_enc_p = jnp.zeros((1, Dp), jnp.float32).at[0, :D].set(
        b_enc.astype(jnp.float32))
    # Padded vocab columns get a very negative bias so exp() makes them 0.
    b_out_p = jnp.full((1, Vp), -1e30, jnp.float32).at[0, :V].set(
        b_out.astype(jnp.float32))

    grid = (rows_p // tr,)

    out2 = pl.pallas_call(
        _ctc_kernel,
        out_shape=jax.ShapeDtypeStruct((rows_p, Vp), jnp.float32),
        grid_spec=pltpu.PrefetchScalarGridSpec(
            num_scalar_prefetch=0,
            grid=grid,
            in_specs=[
                # Pipelined (double-buffered) row tile of the activations.
                pl.BlockSpec((tr, Dp), lambda i: (i, 0)),
                # Grid-invariant weights / biases: one resident VMEM copy each
                # (no per-step double-buffered DMA).
                pl.BlockSpec(memory_space=pltpu.MemorySpace.VMEM),
                pl.BlockSpec(memory_space=pltpu.MemorySpace.VMEM),
                pl.BlockSpec(memory_space=pltpu.MemorySpace.VMEM),
                pl.BlockSpec(memory_space=pltpu.MemorySpace.VMEM),
            ],
            out_specs=pl.BlockSpec((tr, Vp), lambda i: (i, 0)),
        ),
        compiler_params=pltpu.CompilerParams(
            # Row tiles are independent -> megacore / 2-TC sharding on v7x.
            dimension_semantics=("parallel",),
        ),
    )(x2, w_enc_p, b_enc_p, w_out_p, b_out_p)

    nnet_output = out2[:rows, :V].reshape(N, T, V)
    encoder_out_lens = x_lens  # synthetic encoder preserves lengths
    return nnet_output, encoder_out_lens


def _reference_forward_bf16(x, x_lens, w_enc, b_enc, w_out, b_out):
    """Pure-JAX reference matching the kernel numerics (bf16 MXU, f32 acc)."""
    h = jnp.einsum("ntd,de->nte", x.astype(jnp.bfloat16),
                   w_enc.astype(jnp.bfloat16),
                   preferred_element_type=jnp.float32)
    h = jnp.maximum(h + b_enc, 0.0)
    logits = jnp.einsum("nte,ev->ntv", h.astype(jnp.bfloat16),
                        w_out.astype(jnp.bfloat16),
                        preferred_element_type=jnp.float32)
    logits = logits + b_out
    return jax.nn.log_softmax(logits, axis=-1), x_lens


def _reference_forward_f32(x, x_lens, w_enc, b_enc, w_out, b_out):
    h = jnp.maximum(jnp.einsum("ntd,de->nte", x, w_enc) + b_enc, 0.0)
    logits = jnp.einsum("nte,ev->ntv", h, w_out) + b_out
    return jax.nn.log_softmax(logits, axis=-1), x_lens


if __name__ == "__main__":
    # Small shapes consistent with the module: N=2, T=8, encoder_dim=32, vocab=128.
    N, T, D, V = 2, 8, 32, 128

    key = jax.random.PRNGKey(0)
    kx, ke, kbe, ko, kbo = jax.random.split(key, 5)

    x = jax.random.normal(kx, (N, T, D), dtype=jnp.float32)
    x_lens = jnp.array([T, T - 2], dtype=jnp.int32)

    # Deterministic parameter init (ScaledLinear ~ linear with scaled init).
    w_enc = jax.random.normal(ke, (D, D), dtype=jnp.float32) * (1.0 / D**0.5)
    b_enc = jax.random.normal(kbe, (D,), dtype=jnp.float32) * 0.01
    w_out = jax.random.normal(ko, (D, V), dtype=jnp.float32) * (1.0 / D**0.5)
    b_out = jax.random.normal(kbo, (V,), dtype=jnp.float32) * 0.01

    # TODO(synk): real Conformer encoder (conv subsampling + attention) is out of
    # scope; a deterministic Linear+ReLU stand-in is used for EncoderInterface.

    log_probs, out_lens = ctc_model_forward(x, x_lens, w_enc, b_enc, w_out, b_out)
    jax.block_until_ready(log_probs)

    ref_lp, ref_lens = _reference_forward_bf16(x, x_lens, w_enc, b_enc, w_out, b_out)
    ref_lp32, _ = _reference_forward_f32(x, x_lens, w_enc, b_enc, w_out, b_out)

    assert log_probs.shape == (N, T, V)
    assert jnp.all(out_lens == ref_lens)
    # Matches the bf16-MXU reference tightly; close to the pure-f32 reference.
    assert jnp.allclose(log_probs, ref_lp, atol=1e-2, rtol=1e-2)
    assert jnp.allclose(log_probs, ref_lp32, atol=1e-1, rtol=1e-1)
    # log_softmax rows must sum to 1 in prob space (padded vocab contributes 0).
    assert jnp.allclose(jnp.sum(jnp.exp(log_probs), axis=-1), 1.0, atol=1e-3)

    print("KERNEL_OK")
</pallas_src>

<mosaic_0001>
module attributes {stable_mosaic.version = 11 : i64} {
  func.func @_ctc_kernel(%arg0: i32, %arg1: memref<16x128xbf16, #tpu.memory_space<vmem>>, %arg2: memref<128x128xbf16, #tpu.memory_space<vmem>>, %arg3: memref<1x128xf32, #tpu.memory_space<vmem>>, %arg4: memref<128x128xbf16, #tpu.memory_space<vmem>>, %arg5: memref<1x128xf32, #tpu.memory_space<vmem>>, %arg6: memref<16x128xf32, #tpu.memory_space<vmem>>) attributes {dimension_semantics = [#tpu.dimension_semantics<parallel>], iteration_bounds = array<i64: 1>, scalar_prefetch = 0 : i64, scratch_operands = 0 : i64, tpu.core_type = #tpu.core_type<tc>, window_params = [{transform_indices = @transform_0, window_bounds = array<i64: 16, 128>}, {pipeline_mode = #tpu.pipeline_mode<synchronous>, transform_indices = @transform_1, window_bounds = array<i64: 128, 128>}, {pipeline_mode = #tpu.pipeline_mode<synchronous>, transform_indices = @transform_2, window_bounds = array<i64: 1, 128>}, {pipeline_mode = #tpu.pipeline_mode<synchronous>, transform_indices = @transform_3, window_bounds = array<i64: 128, 128>}, {pipeline_mode = #tpu.pipeline_mode<synchronous>, transform_indices = @transform_4, window_bounds = array<i64: 1, 128>}, {transform_indices = @transform_5, window_bounds = array<i64: 16, 128>}]} {
    %c0 = arith.constant 0 : index
    %c0_0 = arith.constant 0 : index
    %0 = vector.load %arg1[%c0, %c0_0] : memref<16x128xbf16, #tpu.memory_space<vmem>>, vector<16x128xbf16>
    %c0_1 = arith.constant 0 : index
    %c0_2 = arith.constant 0 : index
    %1 = vector.load %arg2[%c0_1, %c0_2] : memref<128x128xbf16, #tpu.memory_space<vmem>>, vector<128x128xbf16>
    %cst = arith.constant dense<0.000000e+00> : vector<16x128xf32>
    %2 = tpu.matmul %0, %1, %cst {dimension_numbers = #tpu.dot_dimension_numbers<[1], [0], [0], [1], [0, 0, 1, 1], [], []>} : vector<16x128xbf16>, vector<128x128xbf16>, vector<16x128xf32> -> vector<16x128xf32>
    %c0_3 = arith.constant 0 : index
    %c0_4 = arith.constant 0 : index
    %3 = vector.load %arg3[%c0_3, %c0_4] : memref<1x128xf32, #tpu.memory_space<vmem>>, vector<1x128xf32>
    %4 = vector.broadcast %3 : vector<1x128xf32> to vector<16x128xf32>
    %5 = arith.addf %2, %4 : vector<16x128xf32>
    %cst_5 = arith.constant 0.000000e+00 : f32
    %6 = vector.broadcast %cst_5 : f32 to vector<16x128xf32>
    %7 = arith.maximumf %5, %6 : vector<16x128xf32>
    %8 = arith.truncf %7 : vector<16x128xf32> to vector<16x128xbf16>
    %c0_6 = arith.constant 0 : index
    %c0_7 = arith.constant 0 : index
    %9 = vector.load %arg4[%c0_6, %c0_7] : memref<128x128xbf16, #tpu.memory_space<vmem>>, vector<128x128xbf16>
    %cst_8 = arith.constant dense<0.000000e+00> : vector<16x128xf32>
    %10 = tpu.matmul %8, %9, %cst_8 {dimension_numbers = #tpu.dot_dimension_numbers<[1], [0], [0], [1], [0, 0, 1, 1], [], []>} : vector<16x128xbf16>, vector<128x128xbf16>, vector<16x128xf32> -> vector<16x128xf32>
    %c0_9 = arith.constant 0 : index
    %c0_10 = arith.constant 0 : index
    %11 = vector.load %arg5[%c0_9, %c0_10] : memref<1x128xf32, #tpu.memory_space<vmem>>, vector<1x128xf32>
    %12 = vector.broadcast %11 : vector<1x128xf32> to vector<16x128xf32>
    %13 = arith.addf %10, %12 : vector<16x128xf32>
    %cst_11 = arith.constant dense<0xFF800000> : vector<16xf32>
    %14 = vector.multi_reduction <maximumf>, %13, %cst_11 [1] : vector<16x128xf32> to vector<16xf32>
    %15 = vector.shape_cast %14 : vector<16xf32> to vector<16x1xf32>
    %16 = vector.broadcast %15 : vector<16x1xf32> to vector<16x128xf32>
    %17 = arith.subf %13, %16 : vector<16x128xf32>
    %18 = math.exp %17 : vector<16x128xf32>
    %cst_12 = arith.constant dense<0.000000e+00> : vector<16xf32>
    %19 = vector.multi_reduction <add>, %18, %cst_12 [1] : vector<16x128xf32> to vector<16xf32>
    %20 = vector.shape_cast %19 : vector<16xf32> to vector<16x1xf32>
    %21 = math.log %20 : vector<16x1xf32>
    %22 = vector.broadcast %21 : vector<16x1xf32> to vector<16x128xf32>
    %23 = arith.subf %17, %22 : vector<16x128xf32>
    %c0_13 = arith.constant 0 : index
    %c0_14 = arith.constant 0 : index
    %24 = vector.load %arg6[%c0_13, %c0_14] : memref<16x128xf32, #tpu.memory_space<vmem>>, vector<16x128xf32>
    tpu.vector_store %arg6[%c0_13, %c0_14], %23 {strides = array<i32>} : memref<16x128xf32, #tpu.memory_space<vmem>>, vector<16x128xf32>,
    return
  }
  func.func @transform_0(%arg0: i32) -> (i32, i32) {
    %c0_i32 = arith.constant 0 : i32
    %c0_i32_0 = arith.constant 0 : i32
    return %arg0, %c0_i32 : i32, i32
  }
  func.func @transform_1(%arg0: i32) -> (i32, i32) {
    %c0_i32 = arith.constant 0 : i32
    %c0_i32_0 = arith.constant 0 : i32
    %c0_i32_1 = arith.constant 0 : i32
    return %c0_i32, %c0_i32_0 : i32, i32
  }
  func.func @transform_2(%arg0: i32) -> (i32, i32) {
    %c0_i32 = arith.constant 0 : i32
    %c0_i32_0 = arith.constant 0 : i32
    %c0_i32_1 = arith.constant 0 : i32
    return %c0_i32, %c0_i32_0 : i32, i32
  }
  func.func @transform_3(%arg0: i32) -> (i32, i32) {
    %c0_i32 = arith.constant 0 : i32
    %c0_i32_0 = arith.constant 0 : i32
    %c0_i32_1 = arith.constant 0 : i32
    return %c0_i32, %c0_i32_0 : i32, i32
  }
  func.func @transform_4(%arg0: i32) -> (i32, i32) {
    %c0_i32 = arith.constant 0 : i32
    %c0_i32_0 = arith.constant 0 : i32
    %c0_i32_1 = arith.constant 0 : i32
    return %c0_i32, %c0_i32_0 : i32, i32
  }
  func.func @transform_5(%arg0: i32) -> (i32, i32) {
    %c0_i32 = arith.constant 0 : i32
    %c0_i32_0 = arith.constant 0 : i32
    return %arg0, %c0_i32 : i32, i32
  }
}

</mosaic_0001>

<llo_original>
// kernel: ctc_model_forward.1
$region0: #{ctc_model_forward.1}
  #allocation0 [shape = 'u32[]', space=smem, size = 0x4, offset = 0x4, fixed_abs, tag = 'smem constant byte address 0x4 - core index']
  #allocation1 [shape = 'u32[144,128]{1,0:T(1,128)}', space=vmem, size = 0x12000, scoped, tag = 'internal scratch']
  %s0 = inlined_call_operand.vmem [shape: bf16[16,128], index: 0, kind: input, shape index: {}]
  %s1 = inlined_call_operand.vmem [shape: bf16[128,128], index: 1, kind: input, shape index: {}]
  %s2 = inlined_call_operand.vmem [shape: f32[1,128], index: 2, kind: input, shape index: {}]
  %s3 = inlined_call_operand.vmem [shape: bf16[128,128], index: 3, kind: input, shape index: {}]
  %s4 = inlined_call_operand.vmem [shape: f32[1,128], index: 4, kind: input, shape index: {}]
  %s5 = inlined_call_operand.hbm [shape: f32[16,128], index: 5, kind: output, shape index: {}]
  %s6 = sld [smem:[#allocation0]]
  $region30: #{ctc_model_forward.1} parent=0
    _
  %s8 = ssub.s32 1, %s6
  %s9 = scalar_select 0, %s8, %s6
  $region1: #{ctc_model_forward.1} parent=0
    #allocation2 [shape = 'u8[8192]{0}', space=vmem, size = 0x2000, scoped, tag = 'output window, operand 0, single buffered']
    #allocation3 [shape = 's32[1]{0}', space=sflag, size = 0x4, scoped, tag = 'scoped memory for ctc_model_forward.1']
    %10 = vsyncpa [#allocation3], 0
    // Predicated region
    $region2: #{ctc_model_forward.1} parent=1 // pred_check
      _
    $region3: #{ctc_model_forward.1} parent=1 // pred_check_branch
      %12 = sbr.rel (0) target = $region5
    $region4: #{ctc_model_forward.1} parent=1 // pred_region
      _
    $region5: #{ctc_model_forward.1} parent=1 // pred_fallthru
      _
    // Predicated region
    $region6: #{ctc_model_forward.1} parent=1 // pred_check
      _
    $region7: #{ctc_model_forward.1} parent=1 // pred_check_branch
      %14 = sbr.rel (0) target = $region9
    $region8: #{ctc_model_forward.1} parent=1 // pred_region
      _
    $region9: #{ctc_model_forward.1} parent=1 // pred_fallthru
      _
    // Predicated region
    $region10: #{ctc_model_forward.1} parent=1 // pred_check
      _
    $region11: #{ctc_model_forward.1} parent=1 // pred_check_branch
      %16 = sbr.rel (0) target = $region13
    $region12: #{ctc_model_forward.1} parent=1 // pred_region
      _
    $region13: #{ctc_model_forward.1} parent=1 // pred_fallthru
      _
    // Predicated region
    $region14: #{ctc_model_forward.1} parent=1 // pred_check
      _
    $region15: #{ctc_model_forward.1} parent=1 // pred_check_branch
      %18 = sbr.rel (0) target = $region17
    $region16: #{ctc_model_forward.1} parent=1 // pred_region
      _
    $region17: #{ctc_model_forward.1} parent=1 // pred_fallthru
      _
    // Predicated region
    $region18: #{ctc_model_forward.1} parent=1 // pred_check
      _
    $region19: #{ctc_model_forward.1} parent=1 // pred_check_branch
      %20 = sbr.rel (0) target = $region21
    $region20: #{ctc_model_forward.1} parent=1 // pred_region
      _
    $region21: #{ctc_model_forward.1} parent=1 // pred_fallthru
      _
    %v22 = vld [vmem:[%s0] sm:$0xf]
    %v23 = vld [vmem:[%s0 + $0x4] sm:$0xf]
    %v24 = vld [vmem:[%s1] sm:$0xf]
    %v25 = vld [vmem:[%s1 + $0x4] sm:$0xf]
    %v26 = vld [vmem:[%s1 + $0x8] sm:$0xf]
    %v27 = vld [vmem:[%s1 + $0xc] sm:$0xf]
    %v28 = vld [vmem:[%s1 + $0x10] sm:$0xf]
    %v29 = vld [vmem:[%s1 + $0x14] sm:$0xf]
    %v30 = vld [vmem:[%s1 + $0x18] sm:$0xf]
    %v31 = vld [vmem:[%s1 + $0x1c] sm:$0xf]
    %v32 = vld [vmem:[%s1 + $0x20] sm:$0xf]
    %v33 = vld [vmem:[%s1 + $0x24] sm:$0xf]
    %v34 = vld [vmem:[%s1 + $0x28] sm:$0xf]
    %v35 = vld [vmem:[%s1 + $0x2c] sm:$0xf]
    %v36 = vld [vmem:[%s1 + $0x30] sm:$0xf]
    %v37 = vld [vmem:[%s1 + $0x34] sm:$0xf]
    %v38 = vld [vmem:[%s1 + $0x38] sm:$0xf]
    %v39 = vld [vmem:[%s1 + $0x3c] sm:$0xf]
    %v40 = vld [vmem:[%s2] sm:$0x1]
    %v42 = vlaneseq
    %v43 = vshrl.u32 %v42, 7
    %v44 = vsub.s32 0, %v43
    %v45 = vrot.slane %v40, %v44
    %v49 = vunpack.c.l.b16 %v22
    %v50 = vunpack.c.l.b16 %v23
    %v51 = vpack.c.b16 %v50, %v49
    %v69 = vunpack.c.l.b16 %v24
    %v70 = vunpack.c.l.b16 %v25
    %v71 = vunpack.c.l.b16 %v26
    %v72 = vunpack.c.l.b16 %v27
    %v73 = vunpack.c.l.b16 %v28
    %v74 = vunpack.c.l.b16 %v29
    %v75 = vunpack.c.l.b16 %v30
    %v76 = vunpack.c.l.b16 %v31
    %v77 = vunpack.c.l.b16 %v32
    %v78 = vunpack.c.l.b16 %v33
    %v79 = vunpack.c.l.b16 %v34
    %v80 = vunpack.c.l.b16 %v35
    %v81 = vunpack.c.l.b16 %v36
    %v82 = vunpack.c.l.b16 %v37
    %v83 = vunpack.c.l.b16 %v38
    %v84 = vunpack.c.l.b16 %v39
    %v85 = vpack.c.b16 %v70, %v69
    %v86 = vpack.c.b16 %v72, %v71
    %v87 = vpack.c.b16 %v74, %v73
    %v88 = vpack.c.b16 %v76, %v75
    %v89 = vpack.c.b16 %v78, %v77
    %v90 = vpack.c.b16 %v80, %v79
    %v91 = vpack.c.b16 %v82, %v81
    %v92 = vpack.c.b16 %v84, %v83
    %101 = vmatprep.subr.bf16.mxu0 0
    %102 = vmatpush1.bf16.msra.mxu0 %v85
    %103 = vmatprep.subr.bf16.mxu0 0
    %104 = vmatpush1.bf16.msra.mxu0 %v86
    %105 = vmatprep.subr.bf16.mxu0 0
    %106 = vmatpush1.bf16.msra.mxu0 %v87
    %107 = vmatprep.subr.bf16.mxu0 0
    %108 = vmatpush1.bf16.msra.mxu0 %v88
    %109 = vmatprep.subr.bf16.mxu0 0
    %110 = vmatpush1.bf16.msra.mxu0 %v89
    %111 = vmatprep.subr.bf16.mxu0 0
    %112 = vmatpush1.bf16.msra.mxu0 %v90
    %113 = vmatprep.subr.bf16.mxu0 0
    %114 = vmatpush1.bf16.msra.mxu0 %v91
    %115 = vmatprep.subr.bf16.mxu0 0
    %116 = vmatpush1.bf16.msra.mxu0 %v92
    %117 = vmatprep.subr.bf16.mxu0 0
    %118 = vmatpush1.bf16.msra.mxu0 0
    %119 = vmatprep.subr.bf16.mxu0 0
    %120 = vmatpush1.bf16.msra.mxu0 0
    %121 = vmatprep.subr.bf16.mxu0 0
    %122 = vmatpush1.bf16.msra.mxu0 0
    %123 = vmatprep.subr.bf16.mxu0 0
    %124 = vmatpush1.bf16.msra.mxu0 0
    %125 = vmatprep.subr.bf16.mxu0 0
    %126 = vmatpush1.bf16.msra.mxu0 0
    %127 = vmatprep.subr.bf16.mxu0 0
    %128 = vmatpush1.bf16.msra.mxu0 0
    %129 = vmatprep.subr.bf16.mxu0 0
    %130 = vmatpush1.bf16.msra.mxu0 0
    %131 = vmatprep.subr.bf16.mxu0 0
    %132 = vmatpush1.bf16.msra.mxu0 0
    %133 = vmatprep.mubr.bf16.mxu0 0
    %134 = vmatmul.mubr.bf16.gmra.mrb[0].mxu0 %v51
    %v135 = vpop.f32.mrb[0].mxu0
    %v136 = vadd.f32 %v45, %v135
    %v137 = vpop.f32.mrb[0].mxu0
    %v138 = vpop.f32.mrb[0].mxu0
    %v139 = vadd.f32 %v45, %v138
    %v140 = vpop.f32.mrb[0].mxu0
    %141 = vdwg.mxu0
    %v142 = vmax.f32 %v136, 0.0
    %v143 = vmax.f32 %v139, 0.0
    %v144 = vpack.c.bf16 %v143, %v142
    %v145 = vld [vmem:[%s3] sm:$0xf]
    %v146 = vld [vmem:[%s3 + $0x4] sm:$0xf]
    %v147 = vld [vmem:[%s3 + $0x8] sm:$0xf]
    %v148 = vld [vmem:[%s3 + $0xc] sm:$0xf]
    %v149 = vld [vmem:[%s3 + $0x10] sm:$0xf]
    %v150 = vld [vmem:[%s3 + $0x14] sm:$0xf]
    %v151 = vld [vmem:[%s3 + $0x18] sm:$0xf]
    %v152 = vld [vmem:[%s3 + $0x1c] sm:$0xf]
    %v153 = vld [vmem:[%s3 + $0x20] sm:$0xf]
    %v154 = vld [vmem:[%s3 + $0x24] sm:$0xf]
    %v155 = vld [vmem:[%s3 + $0x28] sm:$0xf]
    %v156 = vld [vmem:[%s3 + $0x2c] sm:$0xf]
    %v157 = vld [vmem:[%s3 + $0x30] sm:$0xf]
    %v158 = vld [vmem:[%s3 + $0x34] sm:$0xf]
    %v159 = vld [vmem:[%s3 + $0x38] sm:$0xf]
    %v160 = vld [vmem:[%s3 + $0x3c] sm:$0xf]
    %v161 = vld [vmem:[%s4] sm:$0x1]
    %v163 = vlaneseq
    %v164 = vshrl.u32 %v163, 7
    %v165 = vsub.s32 0, %v164
    %v166 = vrot.slane %v161, %v165
    %v184 = vunpack.c.l.b16 %v145
    %v185 = vunpack.c.l.b16 %v146
    %v186 = vunpack.c.l.b16 %v147
    %v187 = vunpack.c.l.b16 %v148
    %v188 = vunpack.c.l.b16 %v149
    %v189 = vunpack.c.l.b16 %v150
    %v190 = vunpack.c.l.b16 %v151
    %v191 = vunpack.c.l.b16 %v152
    %v192 = vunpack.c.l.b16 %v153
    %v193 = vunpack.c.l.b16 %v154
    %v194 = vunpack.c.l.b16 %v155
    %v195 = vunpack.c.l.b16 %v156
    %v196 = vunpack.c.l.b16 %v157
    %v197 = vunpack.c.l.b16 %v158
    %v198 = vunpack.c.l.b16 %v159
    %v199 = vunpack.c.l.b16 %v160
    %v200 = vpack.c.b16 %v185, %v184
    %v201 = vpack.c.b16 %v187, %v186
    %v202 = vpack.c.b16 %v189, %v188
    %v203 = vpack.c.b16 %v191, %v190
    %v204 = vpack.c.b16 %v193, %v192
    %v205 = vpack.c.b16 %v195, %v194
    %v206 = vpack.c.b16 %v197, %v196
    %v207 = vpack.c.b16 %v199, %v198
    %216 = vmatprep.subr.bf16.mxu0 0
    %217 = vmatpush1.bf16.msra.mxu0 %v200
    %218 = vmatprep.subr.bf16.mxu0 0
    %219 = vmatpush1.bf16.msra.mxu0 %v201
    %220 = vmatprep.subr.bf16.mxu0 0
    %221 = vmatpush1.bf16.msra.mxu0 %v202
    %222 = vmatprep.subr.bf16.mxu0 0
    %223 = vmatpush1.bf16.msra.mxu0 %v203
    %224 = vmatprep.subr.bf16.mxu0 0
    %225 = vmatpush1.bf16.msra.mxu0 %v204
    %226 = vmatprep.subr.bf16.mxu0 0
    %227 = vmatpush1.bf16.msra.mxu0 %v205
    %228 = vmatprep.subr.bf16.mxu0 0
    %229 = vmatpush1.bf16.msra.mxu0 %v206
    %230 = vmatprep.subr.bf16.mxu0 0
    %231 = vmatpush1.bf16.msra.mxu0 %v207
    %232 = vmatprep.subr.bf16.mxu0 0
    %233 = vmatpush1.bf16.msra.mxu0 0
    %234 = vmatprep.subr.bf16.mxu0 0
    %235 = vmatpush1.bf16.msra.mxu0 0
    %236 = vmatprep.subr.bf16.mxu0 0
    %237 = vmatpush1.bf16.msra.mxu0 0
    %238 = vmatprep.subr.bf16.mxu0 0
    %239 = vmatpush1.bf16.msra.mxu0 0
    %240 = vmatprep.subr.bf16.mxu0 0
    %241 = vmatpush1.bf16.msra.mxu0 0
    %242 = vmatprep.subr.bf16.mxu0 0
    %243 = vmatpush1.bf16.msra.mxu0 0
    %244 = vmatprep.subr.bf16.mxu0 0
    %245 = vmatpush1.bf16.msra.mxu0 0
    %246 = vmatprep.subr.bf16.mxu0 0
    %247 = vmatpush1.bf16.msra.mxu0 0
    %248 = vmatprep.mubr.bf16.mxu0 0
    %249 = vmatmul.mubr.bf16.gmra.mrb[0].mxu0 %v144
    %v250 = vpop.f32.mrb[0].mxu0
    %v251 = vadd.f32 %v166, %v250
    %v252 = vpop.f32.mrb[0].mxu0
    %v253 = vpop.f32.mrb[0].mxu0
    %v254 = vadd.f32 %v166, %v253
    %v255 = vpop.f32.mrb[0].mxu0
    %256 = vdwg.mxu0
    %257 = vmax.xlane.f32.xlu0 %v251
    %v258 = vpop.xlane.xlu0 %257
    %259 = vmax.xlane.f32.xlu0 %v254
    %v260 = vpop.xlane.xlu0 %259
    %v261 = vsub.f32 %v251, %v258
    %v262 = vsub.f32 %v254, %v260
    %v263 = vmul.f32 %v261, 1.442695
    %v264 = vpow.pop %v263
    %v265 = vmul.f32 %v262, 1.442695
    %v266 = vpow.pop %v265
    %267 = vadd.xlane.f32.xlu0 %v264
    %v268 = vpop.xlane.xlu0 %267
    %269 = vadd.xlane.f32.xlu0 %v266
    %v270 = vpop.xlane.xlu0 %269
    %v271 = vlog2.pop %v268
    %v272 = vmul.f32 %v271, 0.6931472
    %v273 = vlog2.pop %v270
    %v274 = vmul.f32 %v273, 0.6931472
    %v275 = vsub.f32 %v261, %v272
    %v276 = vsub.f32 %v262, %v274
    %277 = vst [vmem:[#allocation2] sm:$0xff] %v275
    %278 = vst [vmem:[#allocation2 + $0x8] sm:$0xff] %v276
    // Predicated region
    $region22: #{ctc_model_forward.1} parent=1 // pred_check
      _
    $region23: #{ctc_model_forward.1} parent=1 // pred_check_branch
      %280 = sbr.rel (0) target = $region25
    $region24: #{ctc_model_forward.1} parent=1 // pred_region
      %s282 = ssub.s32 256, 256
      %283 = vsyncadd [#allocation3], %s282
      %s284 = sshll.u32 [#allocation2], 4
      %s285 = int_to_ptr.vmem [resolvable:$true] %s284
      %290 = dma.vmem_to_hbm [thread:$0]  %s285, 256, %s5, [#allocation3], 128, 128, 8
    $region25: #{ctc_model_forward.1} parent=1 // pred_fallthru
      _
    // Predicated region
    $region26: #{ctc_model_forward.1} parent=1 // pred_check
      _
    $region27: #{ctc_model_forward.1} parent=1 // pred_check_branch
      %292 = sbr.rel (0) target = $region29
    $region28: #{ctc_model_forward.1} parent=1 // pred_region
      %293 = dma.done [#allocation3], 256
    $region29: #{ctc_model_forward.1} parent=1 // pred_fallthru
      _
    %294 = vsyncpa [#allocation3], 1

</llo_original>
